<compile_context>
chip_gen: v5e
topology: v5e:2x2
jax: 0.10.0
libtpu: 0.0.40
codegen_flags: <defaults>
</compile_context>

<pallas_src>
import jax
import jax.numpy as jnp
from jax.experimental import pallas as pl
from jax.experimental.pallas import tpu as pltpu

# ----- problem sizes (small, consistent with the module) -----
BATCH = 8
IN_CH = 32
HID = IN_CH // 2          # Linear(input_channel, input_channel // 2)
OUT_CH = 8


def _round_up(n, m):
    return ((n + m - 1) // m) * m


def _choose_block_b(b):
    """Batch tile: one step for small B; large tiles (>=2 steps) for big B."""
    if b <= 1024:
        return _round_up(b, 8)
    # Large B: amortize per-step overhead with big tiles, but keep >=2 grid
    # steps so the "parallel" axis shards across v7x's two TensorCores.
    return min(4096, _round_up(pl.cdiv(b, 2), 8))


# --------------------------- fused MLP kernel ------------------------------
def make_mlp_kernel(in_aug, hid, out_ch):
    """Kernel closure over the packed-parameter layout.

    x_ref : (tb, in_aug)      activations, col[in_ch]=1 (bias), rest zero-pad
    p_ref : (p_rows, p_cols)  packed params:
              rows [0, in_aug)            -> w1 stacked with b1 (+ zero pad)
              rows [in_aug, in_aug+hid)   -> w2   (first out_ch cols)
              row  in_aug+hid             -> b2   (first out_ch cols)
    o_ref : (tb, out_ch)
    """
    def kernel(x_ref, p_ref, o_ref):
        x_aug = x_ref[...]                                        # (tb, in_aug)
        w1a = p_ref[0:in_aug, 0:hid]                              # (in_aug, hid)
        w2 = p_ref[in_aug:in_aug + hid, 0:out_ch]                 # (hid, out_ch)
        b2 = p_ref[in_aug + hid:in_aug + hid + 1, 0:out_ch]       # (1, out_ch)

        # Linear 1 (bias folded into the matmul) + ReLU.
        h = jnp.dot(x_aug, w1a, preferred_element_type=jnp.float32)
        h = jnp.maximum(h, 0.0).astype(x_ref.dtype)               # (tb, hid)

        # Linear 2 (f32 accumulation, explicit f32 bias add).
        y = jnp.dot(h, w2, preferred_element_type=jnp.float32)
        y = y + b2.astype(jnp.float32)
        o_ref[...] = y.astype(o_ref.dtype)

    return kernel


def softmax_mlp_forward(x, w1, b1, w2, b2, *, block_b=None, use_bf16=None):
    """x: (B, IN) f32 -> (B, OUT) f32.  Single fused pallas_call."""
    b, in_ch = x.shape
    hid = w1.shape[1]
    out_ch = w2.shape[1]

    # bf16 MXU inputs only pay off once the kernel is HBM-read bound (large B).
    if use_bf16 is None:
        use_bf16 = b >= 4096
    compute_dtype = jnp.bfloat16 if use_bf16 else jnp.float32

    # ---- augment x with a ones column (sublane-aligned width) --------------
    in_aug = _round_up(in_ch + 1, 8)
    x_aug = jnp.zeros((b, in_aug), jnp.float32)
    x_aug = x_aug.at[:, :in_ch].set(x)
    x_aug = x_aug.at[:, in_ch].set(1.0)

    # ---- pack all parameters into ONE buffer (single resident DMA) ---------
    p_rows = _round_up(in_aug + hid + 1, 8)
    p_cols = max(hid, out_ch)
    params = jnp.zeros((p_rows, p_cols), jnp.float32)
    params = params.at[0:in_ch, 0:hid].set(w1)
    params = params.at[in_ch, 0:hid].set(b1.reshape(-1))
    params = params.at[in_aug:in_aug + hid, 0:out_ch].set(w2)
    params = params.at[in_aug + hid, 0:out_ch].set(b2.reshape(-1))

    x_aug = x_aug.astype(compute_dtype)
    params = params.astype(compute_dtype)

    # ---- batch tiling / padding (handles non-multiple batch sizes) ---------
    if block_b is None:
        block_b = _choose_block_b(b)
    block_b = max(8, _round_up(block_b, 8))
    b_pad = _round_up(b, block_b)
    if b_pad != b:
        x_aug = jnp.pad(x_aug, ((0, b_pad - b), (0, 0)))
    grid = (b_pad // block_b,)

    out = pl.pallas_call(
        make_mlp_kernel(in_aug, hid, out_ch),
        out_shape=jax.ShapeDtypeStruct((b_pad, out_ch), jnp.float32),
        grid=grid,
        in_specs=[
            # activations: tiled along batch ("parallel" -> v7x megacore)
            pl.BlockSpec((block_b, in_aug), lambda i: (i, 0)),
            # packed params: constant index_map -> VMEM-resident across steps
            pl.BlockSpec((p_rows, p_cols), lambda i: (0, 0)),
        ],
        out_specs=pl.BlockSpec((block_b, out_ch), lambda i: (i, 0)),
        compiler_params=pltpu.CompilerParams(
            dimension_semantics=("parallel",)),
    )(x_aug, params)

    return out[:b]


# ----------------------------- parameters ----------------------------------
def init_params(key):
    k1, k2, k3, k4 = jax.random.split(key, 4)
    # Weights stored as (in, out) so the kernel computes x @ W + b
    # (equivalent to torch Linear with weight = W.T).
    lim1 = 1.0 / jnp.sqrt(IN_CH)
    lim2 = 1.0 / jnp.sqrt(HID)
    w1 = jax.random.uniform(k1, (IN_CH, HID), jnp.float32, -lim1, lim1)
    b1 = jax.random.uniform(k2, (1, HID), jnp.float32, -lim1, lim1)
    w2 = jax.random.uniform(k3, (HID, OUT_CH), jnp.float32, -lim2, lim2)
    b2 = jax.random.uniform(k4, (1, OUT_CH), jnp.float32, -lim2, lim2)
    return w1, b1, w2, b2


# ----------------------- pure-JAX reference (check) -------------------------
def ref_forward(x, w1, b1, w2, b2):
    h = jnp.maximum(x @ w1 + b1, 0.0)
    return h @ w2 + b2


# --------------------------------- main -------------------------------------
if __name__ == "__main__":
    key = jax.random.PRNGKey(0)
    kp, kx = jax.random.split(key)
    w1, b1, w2, b2 = init_params(kp)
    x = jax.random.normal(kx, (BATCH, IN_CH), jnp.float32)

    out = softmax_mlp_forward(x, w1, b1, w2, b2)
    out = jax.block_until_ready(out)

    ref = ref_forward(x, w1, b1, w2, b2)
    assert out.shape == (BATCH, OUT_CH)
    assert jnp.allclose(out, ref, atol=1e-5, rtol=1e-5), (out, ref)

    print("KERNEL_OK")
</pallas_src>

<mosaic_0001>
module attributes {stable_mosaic.version = 11 : i64} {
  func.func @kernel(%arg0: i32, %arg1: memref<8x40xf32, #tpu.memory_space<vmem>>, %arg2: memref<64x16xf32, #tpu.memory_space<vmem>>, %arg3: memref<8x8xf32, #tpu.memory_space<vmem>>) attributes {dimension_semantics = [#tpu.dimension_semantics<parallel>], iteration_bounds = array<i64: 1>, scalar_prefetch = 0 : i64, scratch_operands = 0 : i64, tpu.core_type = #tpu.core_type<tc>, window_params = [{transform_indices = @transform_0, window_bounds = array<i64: 8, 40>}, {pipeline_mode = #tpu.pipeline_mode<synchronous>, transform_indices = @transform_1, window_bounds = array<i64: 64, 16>}, {transform_indices = @transform_2, window_bounds = array<i64: 8, 8>}]} {
    %c0 = arith.constant 0 : index
    %c0_0 = arith.constant 0 : index
    %0 = vector.load %arg1[%c0, %c0_0] : memref<8x40xf32, #tpu.memory_space<vmem>>, vector<8x40xf32>
    %c0_1 = arith.constant 0 : index
    %c0_2 = arith.constant 0 : index
    %1 = vector.load %arg2[%c0_1, %c0_2] : memref<64x16xf32, #tpu.memory_space<vmem>>, vector<40x16xf32>
    %c40 = arith.constant 40 : index
    %c0_3 = arith.constant 0 : index
    %2 = vector.load %arg2[%c40, %c0_3] : memref<64x16xf32, #tpu.memory_space<vmem>>, vector<16x8xf32>
    %c56 = arith.constant 56 : index
    %c0_4 = arith.constant 0 : index
    %3 = vector.load %arg2[%c56, %c0_4] : memref<64x16xf32, #tpu.memory_space<vmem>>, vector<1x8xf32>
    %cst = arith.constant dense<0.000000e+00> : vector<8x16xf32>
    %4 = tpu.matmul %0, %1, %cst {dimension_numbers = #tpu.dot_dimension_numbers<[1], [0], [0], [1], [0, 0, 1, 1], [], []>} : vector<8x40xf32>, vector<40x16xf32>, vector<8x16xf32> -> vector<8x16xf32>
    %cst_5 = arith.constant 0.000000e+00 : f32
    %5 = vector.broadcast %cst_5 : f32 to vector<8x16xf32>
    %6 = arith.maximumf %4, %5 : vector<8x16xf32>
    %cst_6 = arith.constant dense<0.000000e+00> : vector<8x8xf32>
    %7 = tpu.matmul %6, %2, %cst_6 {dimension_numbers = #tpu.dot_dimension_numbers<[1], [0], [0], [1], [0, 0, 1, 1], [], []>} : vector<8x16xf32>, vector<16x8xf32>, vector<8x8xf32> -> vector<8x8xf32>
    %8 = vector.broadcast %3 : vector<1x8xf32> to vector<8x8xf32>
    %9 = arith.addf %7, %8 : vector<8x8xf32>
    %c0_7 = arith.constant 0 : index
    %c0_8 = arith.constant 0 : index
    %10 = vector.load %arg3[%c0_7, %c0_8] : memref<8x8xf32, #tpu.memory_space<vmem>>, vector<8x8xf32>
    tpu.vector_store %arg3[%c0_7, %c0_8], %9 {strides = array<i32>} : memref<8x8xf32, #tpu.memory_space<vmem>>, vector<8x8xf32>,
    return
  }
  func.func @transform_0(%arg0: i32) -> (i32, i32) {
    %c0_i32 = arith.constant 0 : i32
    %c0_i32_0 = arith.constant 0 : i32
    return %arg0, %c0_i32 : i32, i32
  }
  func.func @transform_1(%arg0: i32) -> (i32, i32) {
    %c0_i32 = arith.constant 0 : i32
    %c0_i32_0 = arith.constant 0 : i32
    %c0_i32_1 = arith.constant 0 : i32
    return %c0_i32, %c0_i32_0 : i32, i32
  }
  func.func @transform_2(%arg0: i32) -> (i32, i32) {
    %c0_i32 = arith.constant 0 : i32
    %c0_i32_0 = arith.constant 0 : i32
    return %arg0, %c0_i32 : i32, i32
  }
}

</mosaic_0001>

<llo_original>
// kernel: tpu_custom_call.1
$region0: #{tpu_custom_call.1}
  #allocation0 [shape = 'u32[]', space=smem, size = 0x4, offset = 0x4, fixed_abs, tag = 'smem constant byte address 0x4 - core index']
  #allocation1 [shape = 'u32[72,128]{1,0:T(1,128)}', space=vmem, size = 0x9000, scoped, tag = 'internal scratch']
  %s0 = inlined_call_operand.vmem [shape: f32[8,40], index: 0, kind: input, shape index: {}]
  %s1 = inlined_call_operand.vmem [shape: f32[64,16], index: 1, kind: input, shape index: {}]
  %s2 = inlined_call_operand.hbm [shape: f32[8,8], index: 2, kind: output, shape index: {}]
  %s3 = sld [smem:[#allocation0]]
  $region18: #{tpu_custom_call.1} parent=0
    _
  %s5 = ssub.s32 1, %s3
  %s6 = scalar_select 0, %s5, %s3
  $region1: #{tpu_custom_call.1} parent=0
    #allocation2 [shape = 'u8[4096]{0}', space=vmem, size = 0x1000, scoped, tag = 'output window, operand 0, single buffered']
    #allocation3 [shape = 's32[1]{0}', space=sflag, size = 0x4, scoped, tag = 'scoped memory for tpu_custom_call.1']
    %7 = vsyncpa [#allocation3], 0
    // Predicated region
    $region2: #{tpu_custom_call.1} parent=1 // pred_check
      _
    $region3: #{tpu_custom_call.1} parent=1 // pred_check_branch
      %9 = sbr.rel (0) target = $region5
    $region4: #{tpu_custom_call.1} parent=1 // pred_region
      _
    $region5: #{tpu_custom_call.1} parent=1 // pred_fallthru
      _
    // Predicated region
    $region6: #{tpu_custom_call.1} parent=1 // pred_check
      _
    $region7: #{tpu_custom_call.1} parent=1 // pred_check_branch
      %11 = sbr.rel (0) target = $region9
    $region8: #{tpu_custom_call.1} parent=1 // pred_region
      _
    $region9: #{tpu_custom_call.1} parent=1 // pred_fallthru
      _
    %v12 = vld [vmem:[%s0] sm:$0xff]
    %v13 = vld [vmem:[%s1] sm:$0xff]
    %v14 = vld [vmem:[%s1 + $0x8] sm:$0xff]
    %v15 = vld [vmem:[%s1 + $0x10] sm:$0xff]
    %v16 = vld [vmem:[%s1 + $0x18] sm:$0xff]
    %v17 = vld [vmem:[%s1 + $0x20] sm:$0xff]
    %v18 = vld [vmem:[%s1 + $0x28] sm:$0xff]
    %v19 = vld [vmem:[%s1 + $0x30] sm:$0xff]
    %v20 = vld [vmem:[%s1 + $0x38] sm:$0x1]
    %vm21 = vcmask 326656
    %v23 = vsel %vm21, %v12, 0
    %25 = vmatpush.msra.mxu0 0.0
    %26 = vmatpush.msra.mxu0 0.0
    %27 = vmatpush.msra.mxu0 0.0
    %28 = vmatpush.msra.mxu0 0.0
    %29 = vmatpush.msra.mxu0 0.0
    %30 = vmatpush.msra.mxu0 0.0
    %31 = vmatpush.msra.mxu0 0.0
    %32 = vmatpush.msra.mxu0 0.0
    %33 = vmatpush.msra.mxu0 0.0
    %34 = vmatpush.msra.mxu0 0.0
    %35 = vmatpush.msra.mxu0 0.0
    %36 = vmatpush.msra.mxu0 %v17
    %37 = vmatpush.msra.mxu0 %v16
    %38 = vmatpush.msra.mxu0 %v15
    %39 = vmatpush.msra.mxu0 %v14
    %40 = vmatpush.msra.mxu0 %v13
    %41 = vmatmul.f32.gmra.mxu0 %v23
    %v42 = vpop.f32.mrf.mxu0
    %v43 = vadd.f32 0.0, %v42
    %44 = vdwg.mxu0
    %v45 = vmax.f32 %v43, 0.0
    %v46 = vperm.slane %v20, 0
    %vm47 = vcmask 130048
    %v49 = vsel %vm47, %v45, 0
    %51 = vmatpush.msra.mxu0 0.0
    %52 = vmatpush.msra.mxu0 0.0
    %53 = vmatpush.msra.mxu0 0.0
    %54 = vmatpush.msra.mxu0 0.0
    %55 = vmatpush.msra.mxu0 0.0
    %56 = vmatpush.msra.mxu0 0.0
    %57 = vmatpush.msra.mxu0 0.0
    %58 = vmatpush.msra.mxu0 0.0
    %59 = vmatpush.msra.mxu0 0.0
    %60 = vmatpush.msra.mxu0 0.0
    %61 = vmatpush.msra.mxu0 0.0
    %62 = vmatpush.msra.mxu0 0.0
    %63 = vmatpush.msra.mxu0 0.0
    %64 = vmatpush.msra.mxu0 0.0
    %65 = vmatpush.msra.mxu0 %v19
    %66 = vmatpush.msra.mxu0 %v18
    %67 = vmatmul.f32.gmra.mxu0 %v49
    %v68 = vpop.f32.mrf.mxu0
    %v69 = vadd.f32 %v46, %v68
    %70 = vdwg.mxu0
    %vm71 = vcmask 64512
    %72 = vst.msk [vmem:[#allocation2] sm:$0xff] %vm71, %v69
    // Predicated region
    $region10: #{tpu_custom_call.1} parent=1 // pred_check
      _
    $region11: #{tpu_custom_call.1} parent=1 // pred_check_branch
      %74 = sbr.rel (0) target = $region13
    $region12: #{tpu_custom_call.1} parent=1 // pred_region
      %76 = vsyncadd [#allocation3], 0
      %s78 = sshll.u32 [#allocation2], 4
      %s79 = int_to_ptr.vmem [resolvable:$true] %s78
      %s80 = sshll.u32 %s2, 4
      %s81 = int_to_ptr.hbm [resolvable:$true] %s80
      %83 = dma.vmem_to_hbm [thread:$0]  %s79, 128, %s81, [#allocation3]
    $region13: #{tpu_custom_call.1} parent=1 // pred_fallthru
      _
    // Predicated region
    $region14: #{tpu_custom_call.1} parent=1 // pred_check
      _
    $region15: #{tpu_custom_call.1} parent=1 // pred_check_branch
      %85 = sbr.rel (0) target = $region17
    $region16: #{tpu_custom_call.1} parent=1 // pred_region
      %87 = dma.done [#allocation3], 128
    $region17: #{tpu_custom_call.1} parent=1 // pred_fallthru
      _
    %88 = vsyncpa [#allocation3], 1

</llo_original>
